<compile_context>
chip_gen: v5e
topology: v5e:2x2
jax: 0.10.0
libtpu: 0.0.40
codegen_flags: <defaults>
</compile_context>

<pallas_src>
import functools

import jax
import jax.numpy as jnp
from jax import lax
from jax.experimental import pallas as pl
from jax.experimental.pallas import tpu as pltpu


# ---------------------------------------------------------------------------
# VMEM sizing helpers (generation-aware; v7x has only 64 MiB per TensorCore).
# ---------------------------------------------------------------------------
@functools.lru_cache(maxsize=1)
def _physical_vmem_bytes():
    try:
        cap = getattr(pltpu.get_tpu_info(), "vmem_capacity_bytes", None)
        if cap:
            return int(cap)
    except Exception:
        pass
    return 64 * 2 ** 20            # conservative fallback (v7x per-core VMEM)


def _vmem_limit(est_bytes):
    cap = int(0.75 * _physical_vmem_bytes())      # leave compiler headroom
    return int(min(cap, max(32 * 2 ** 20, 2 * int(est_bytes))))


def _proj_vmem_bytes(c, tn):
    ins = 2 * 2 * c * tn * 4                      # xd, xr blocks (f32, 2 bufs)
    wts = 2 * 3 * (c * c * 2 + c * 4)             # weights (bf16) + biases
    outs = 2 * 3 * c * tn * 2                     # d1, k, v blocks (bf16, 2 bufs)
    tmps = 3 * c * tn * 4 + 2 * c * tn * 2        # f32 pre-cast temps, bf16 casts
    return ins + wts + outs + tmps


def _flash_vmem_bytes(c, ti, tj):
    io = 2 * ((ti * c + 2 * c * tj + c * ti) * 2 + c * tj * 4)  # blocks, 2 bufs
    scratch = (2 * tj + c * tj) * 4                             # m, l, acc
    tmps = 3 * ti * tj * 4                                      # s, p, exp temp
    return io + scratch + tmps


def _pick_proj_tile(n, c, batch, budget=16 * 2 ** 20):
    cands = [t for t in (2048, 1024, 512, 256, 128)
             if t <= n and n % t == 0 and _proj_vmem_bytes(c, t) <= budget]
    if not cands:
        return n if n < 128 else 128
    for t in cands:                   # largest tile that still gives >= 4 grid
        if batch * (n // t) >= 4:     # steps (DMA overlap + v7x megacore)
            return t
    return cands[-1]


def _pick_attn_tiles(n, c, budget=28 * 2 ** 20):
    # TJ sets the inner-loop arithmetic intensity (~TJ flop/byte), so make it
    # as large as the budget allows; TI mainly amortizes per-step overhead.
    tj_cands = [t for t in (2048, 1024, 512, 256, 128) if t <= n and n % t == 0]
    ti_cands = [t for t in (1024, 512, 256, 128) if t <= n and n % t == 0]
    tj = next((t for t in tj_cands if _flash_vmem_bytes(c, 128, t) <= budget),
              tj_cands[-1])
    ti = next((t for t in ti_cands if _flash_vmem_bytes(c, t, tj) <= budget),
              ti_cands[-1])
    return ti, tj


# ---------------------------------------------------------------------------
# Kernel 1: fused 1x1-conv + folded-BN + ReLU projections on native (B, C, N).
#   Inputs: f32 feature-map tiles (cast to bf16 in-kernel), bf16 weights,
#           f32 biases.
#   Outputs: d1 = relu(conv_d1(f_d)), k = relu(conv_d2(f_d)),
#            v = relu(conv_rgb(f_rgb)) as (1, C, TN) bf16 blocks.
# ---------------------------------------------------------------------------
def _project_kernel(xd_ref, xr_ref, w1_ref, b1_ref, w2_ref, b2_ref,
                    w3_ref, b3_ref, d1_ref, k_ref, v_ref):
    xd = xd_ref[0].astype(jnp.bfloat16)           # (C, TN)
    xr = xr_ref[0].astype(jnp.bfloat16)

    d1 = jnp.dot(w1_ref[...], xd, preferred_element_type=jnp.float32)
    d1_ref[0] = jnp.maximum(d1 + b1_ref[...], 0.0).astype(jnp.bfloat16)

    k = jnp.dot(w2_ref[...], xd, preferred_element_type=jnp.float32)
    k_ref[0] = jnp.maximum(k + b2_ref[...], 0.0).astype(jnp.bfloat16)

    v = jnp.dot(w3_ref[...], xr, preferred_element_type=jnp.float32)
    v_ref[0] = jnp.maximum(v + b3_ref[...], 0.0).astype(jnp.bfloat16)


def _project(xd, xr, params, tn):
    bp, c, npts = xd.shape
    assert npts % tn == 0
    (w1, b1), (w2, b2), (w3, b3) = params
    grid = (bp, npts // tn)
    est = _proj_vmem_bytes(c, tn)

    feat = pl.BlockSpec((1, c, tn), lambda b, g: (b, 0, g))
    wspec = pl.BlockSpec((c, c), lambda b, g: (0, 0))
    bspec = pl.BlockSpec((c, 1), lambda b, g: (0, 0))

    return pl.pallas_call(
        _project_kernel,
        out_shape=tuple(jax.ShapeDtypeStruct((bp, c, npts), jnp.bfloat16)
                        for _ in range(3)),
        grid_spec=pltpu.PrefetchScalarGridSpec(
            num_scalar_prefetch=0,
            grid=grid,
            in_specs=[feat, feat, wspec, bspec, wspec, bspec, wspec, bspec],
            out_specs=[feat, feat, feat]),
        compiler_params=pltpu.CompilerParams(
            dimension_semantics=("parallel", "parallel"),
            vmem_limit_bytes=_vmem_limit(est)),
    )(xd, xr, w1, b1, w2, b2, w3, b3)


# ---------------------------------------------------------------------------
# Kernel 2a: flash-style spatial attention for large levels (N % 128 == 0).
#   grid = (batch, j-block, i-block); i is the softmax reduction axis (last).
#   q  : (1, TI, C) bf16  row block of f_d1^T   (no transpose in the loop)
#   k  : (1, C, TJ) bf16  column block of f_d2
#   vi : (1, C, TI) bf16  row block of f_r
#   vj : (1, C, TJ) bf16  column block of f_r (residual)
#   out: (1, C, TJ) f32, written directly in (B, C, N) layout.
# ---------------------------------------------------------------------------
def _flash_attention_kernel(q_ref, k_ref, vi_ref, vj_ref, o_ref,
                            m_scr, l_scr, acc_scr):
    i = pl.program_id(2)

    @pl.when(i == 0)
    def _init():
        m_scr[...] = jnp.full(m_scr.shape, -jnp.inf, dtype=m_scr.dtype)
        l_scr[...] = jnp.zeros(l_scr.shape, dtype=l_scr.dtype)
        acc_scr[...] = jnp.zeros(acc_scr.shape, dtype=acc_scr.dtype)

    # Score tile (TI, TJ): bf16 MXU operands, f32 accumulation.
    s = jnp.dot(q_ref[0], k_ref[0], preferred_element_type=jnp.float32)

    m_prev = m_scr[...]
    m_new = jnp.maximum(m_prev, jnp.max(s, axis=0, keepdims=True))   # (1, TJ)
    alpha = jnp.exp(m_prev - m_new)
    p = jnp.exp(s - m_new)                                           # (TI, TJ)
    l_scr[...] = alpha * l_scr[...] + jnp.sum(p, axis=0, keepdims=True)
    acc_scr[...] = alpha * acc_scr[...] + jnp.dot(
        vi_ref[0], p.astype(jnp.bfloat16), preferred_element_type=jnp.float32)
    m_scr[...] = m_new

    @pl.when(i == pl.num_programs(2) - 1)
    def _finalize():
        inv_l = pl.reciprocal(l_scr[...], approx=True)
        o_ref[0] = (acc_scr[...] * inv_l
                    + vj_ref[0].astype(jnp.float32)).astype(o_ref.dtype)


def _flash_attention(q, k, v, batch, n, c):
    ti, tj = _pick_attn_tiles(n, c)
    n_i, n_j = n // ti, n // tj
    est = _flash_vmem_bytes(c, ti, tj)
    return pl.pallas_call(
        _flash_attention_kernel,
        out_shape=jax.ShapeDtypeStruct((batch, c, n), jnp.float32),
        grid_spec=pltpu.PrefetchScalarGridSpec(
            num_scalar_prefetch=0,
            grid=(batch, n_j, n_i),
            in_specs=[
                pl.BlockSpec((1, ti, c), lambda b, j, i: (b, i, 0)),
                pl.BlockSpec((1, c, tj), lambda b, j, i: (b, 0, j)),
                pl.BlockSpec((1, c, ti), lambda b, j, i: (b, 0, i)),
                pl.BlockSpec((1, c, tj), lambda b, j, i: (b, 0, j)),
            ],
            out_specs=pl.BlockSpec((1, c, tj), lambda b, j, i: (b, 0, j)),
            scratch_shapes=[pltpu.VMEM((1, tj), jnp.float32),
                            pltpu.VMEM((1, tj), jnp.float32),
                            pltpu.VMEM((c, tj), jnp.float32)]),
        compiler_params=pltpu.CompilerParams(
            dimension_semantics=("parallel", "parallel", "arbitrary"),
            vmem_limit_bytes=_vmem_limit(est)),
    )(q, k, v, v)


# ---------------------------------------------------------------------------
# Kernel 2b: small-level attention (N % 128 != 0), fully lane-dense over the
# folded batch.  Cross-batch scores are masked to -1e30 (block-diagonal
# attention), keeping every operand/store >= 128 lanes wide at tiny H*W.
# ---------------------------------------------------------------------------
def _make_small_attention_kernel(batch, n):
    bn = batch * n

    def kernel(q_ref, k_ref, v_ref, o_ref):
        s = jnp.dot(q_ref[0], k_ref[0],
                    preferred_element_type=jnp.float32)          # (BN, BN)
        if batch > 1:
            ri = lax.broadcasted_iota(jnp.int32, (bn, bn), 0) // n
            ci = lax.broadcasted_iota(jnp.int32, (bn, bn), 1) // n
            s = jnp.where(ri == ci, s, -1e30)
        m = jnp.max(s, axis=0, keepdims=True)
        p = jnp.exp(s - m)
        l = jnp.sum(p, axis=0, keepdims=True)
        v = v_ref[0]
        acc = jnp.dot(v, p.astype(jnp.bfloat16),
                      preferred_element_type=jnp.float32)        # (C, BN)
        o_ref[0] = (acc * pl.reciprocal(l, approx=True)
                    + v.astype(jnp.float32)).astype(o_ref.dtype)

    return kernel


def _small_attention(q, k, v, batch, n, c):
    bn = batch * n
    # TODO(synk): for large batches, group ceil(128/N) batches per grid step to
    # avoid wasted MXU work and oversized BN*BN f32 temporaries.
    est = 2 * (bn * c * 2 + 2 * c * bn * 2 + c * bn * 4) + 4 * bn * bn * 4
    full = lambda g: (0, 0, 0)
    return pl.pallas_call(
        _make_small_attention_kernel(batch, n),
        out_shape=jax.ShapeDtypeStruct((1, c, bn), jnp.float32),
        grid_spec=pltpu.PrefetchScalarGridSpec(
            num_scalar_prefetch=0,
            grid=(1,),
            in_specs=[pl.BlockSpec((1, bn, c), full),
                      pl.BlockSpec((1, c, bn), full),
                      pl.BlockSpec((1, c, bn), full)],
            out_specs=pl.BlockSpec((1, c, bn), full)),
        compiler_params=pltpu.CompilerParams(
            dimension_semantics=("arbitrary",),
            vmem_limit_bytes=_vmem_limit(est)),
    )(q, k, v)


# ---------------------------------------------------------------------------
# Per-level wrapper.
# ---------------------------------------------------------------------------
def spatial_attention_layer(f_rgb, f_d, params):
    B, C, H, W = f_rgb.shape
    assert f_d.shape == f_rgb.shape
    assert C % 8 == 0, "channel count must be a multiple of 8 (TPU sublanes)"
    N = H * W

    if N % 128 == 0:
        # Large level: native (B, C, N) layout end-to-end (no host batch-fold;
        # the attention kernel writes its output directly in (B, C, N)).
        xd = f_d.reshape(B, C, N)
        xr = f_rgb.reshape(B, C, N)
        tn = _pick_proj_tile(N, C, B)
        d1, k, v = _project(xd, xr, params, tn)
        # TODO(synk): produce q inside the projection kernel (transposed-LHS
        # matmul) to save this one bf16 transpose pass per layer.
        q = jnp.transpose(d1, (0, 2, 1))                     # (B, N, C) bf16
        out = _flash_attention(q, k, v, B, N, C)             # (B, C, N) f32
        return out.reshape(B, C, H, W)

    # Small level: fold the batch into the lane axis so every operand / store
    # stays lane-dense, then one block-diagonal attention step.
    BN = B * N
    xd = jnp.transpose(f_d.reshape(B, C, N), (1, 0, 2)).reshape(1, C, BN)
    xr = jnp.transpose(f_rgb.reshape(B, C, N), (1, 0, 2)).reshape(1, C, BN)
    d1, k, v = _project(xd, xr, params, BN)
    q = jnp.transpose(d1, (0, 2, 1))                         # (1, BN, C)
    out = _small_attention(q, k, v, B, N, C)                 # (1, C, BN) f32
    out = jnp.transpose(out.reshape(C, B, N), (1, 0, 2))
    return out.reshape(B, C, H, W)


# ---------------------------------------------------------------------------
# Deterministic parameter construction (conv1x1 + BatchNorm fused, eval mode).
# ---------------------------------------------------------------------------
def init_conv1x1_bn(key, c_in, c_out, eps=1e-5):
    k1, k2, k3, k4, k5, k6 = jax.random.split(key, 6)
    w = 0.1 * jax.random.normal(k1, (c_out, c_in), jnp.float32)
    b = 0.1 * jax.random.normal(k2, (c_out,), jnp.float32)
    gamma = 1.0 + 0.1 * jax.random.normal(k3, (c_out,), jnp.float32)
    beta = 0.1 * jax.random.normal(k4, (c_out,), jnp.float32)
    running_mean = 0.1 * jax.random.normal(k5, (c_out,), jnp.float32)
    running_var = jnp.abs(jax.random.normal(k6, (c_out,), jnp.float32)) + 0.5
    scale = gamma / jnp.sqrt(running_var + eps)
    w_eff = w * scale[:, None]                     # fold BN into conv weight
    b_eff = scale * (b - running_mean) + beta      # fold BN into conv bias
    return w_eff, b_eff.reshape(c_out, 1)


class SpatialAttentionPallas:
    """Matches SpatialAttention.forward: list of feature maps in, list out."""

    def __init__(self, hidden_dim, num_layers, key):
        self.ref_params = []       # per-conv f32 params (reference semantics)
        self.kernel_params = []    # bf16 MXU weights + f32 biases
        dim = hidden_dim
        for li in range(num_layers):
            keys = jax.random.split(jax.random.fold_in(key, li), 3)
            convs = [init_conv1x1_bn(k, dim, dim) for k in keys]
            self.ref_params.append(convs)
            self.kernel_params.append(
                tuple((w.astype(jnp.bfloat16), b) for w, b in convs))
            dim *= 2

    def __call__(self, feat_rgb, feat_d):
        return [spatial_attention_layer(fr, fd, p)
                for fr, fd, p in zip(feat_rgb, feat_d, self.kernel_params)]


# ---------------------------------------------------------------------------
# Pure-JAX f32 reference (for correctness check only).
# ---------------------------------------------------------------------------
def _reference_layer(f_rgb, f_d, layer_params):
    B, C, H, W = f_rgb.shape
    N = H * W

    def cbr(w, b, x):
        y = jnp.einsum('oc,bcn->bon', w, x.reshape(B, C, N)) + b[None]
        return jnp.maximum(y, 0.0)

    (w1, b1), (w2, b2), (w3, b3) = layer_params
    f_d1 = cbr(w1, b1, f_d)
    f_d2 = cbr(w2, b2, f_d)
    f_r = cbr(w3, b3, f_rgb)
    w_d = jnp.einsum('bci,bcj->bij', f_d1, f_d2)
    w_d = jax.nn.softmax(w_d, axis=1)
    out = jnp.einsum('bci,bij->bcj', f_r, w_d) + f_r
    return out.reshape(B, C, H, W)


if __name__ == "__main__":
    key = jax.random.PRNGKey(0)

    # Small pyramid consistent with the module (channels double per layer).
    # Level 0 (48x48, N=2304) exercises the tiled flash-attention path with a
    # multi-block (batch, j, i) grid and multi-step online softmax; level 1
    # (8x8, N=64) exercises the folded lane-dense small-level path.
    B = 2
    hidden_dim = 32
    num_layers = 2
    spatial = [48, 8]

    kin = jax.random.split(key, 2 * num_layers + 1)
    module = SpatialAttentionPallas(hidden_dim, num_layers, kin[-1])

    feat_rgb, feat_d = [], []
    dim = hidden_dim
    for li in range(num_layers):
        hw = spatial[li]
        feat_rgb.append(jax.random.normal(kin[2 * li], (B, dim, hw, hw),
                                          jnp.float32))
        feat_d.append(jax.random.normal(kin[2 * li + 1], (B, dim, hw, hw),
                                        jnp.float32))
        dim *= 2

    outs = module(feat_rgb, feat_d)
    outs = [jax.block_until_ready(o) for o in outs]

    # Verify against the pure-JAX f32 reference (kernel uses bf16 MXU operands
    # and an approx reciprocal, so compare with a relative tolerance).
    for o, fr, fd, p in zip(outs, feat_rgb, feat_d, module.ref_params):
        ref = _reference_layer(fr, fd, p)
        assert o.shape == fr.shape
        rel = float(jnp.max(jnp.abs(o - ref)) / (jnp.max(jnp.abs(ref)) + 1e-6))
        assert rel < 3e-2, f"mismatch vs reference: rel_err={rel}"

    print("KERNEL_OK")
</pallas_src>

<mosaic_0001>
module attributes {stable_mosaic.version = 11 : i64} {
  func.func @_project_kernel(%arg0: i32, %arg1: i32, %arg2: memref<1x32x256xf32, #tpu.memory_space<vmem>>, %arg3: memref<1x32x256xf32, #tpu.memory_space<vmem>>, %arg4: memref<32x32xbf16, #tpu.memory_space<vmem>>, %arg5: memref<32x1xf32, #tpu.memory_space<vmem>>, %arg6: memref<32x32xbf16, #tpu.memory_space<vmem>>, %arg7: memref<32x1xf32, #tpu.memory_space<vmem>>, %arg8: memref<32x32xbf16, #tpu.memory_space<vmem>>, %arg9: memref<32x1xf32, #tpu.memory_space<vmem>>, %arg10: memref<1x32x256xbf16, #tpu.memory_space<vmem>>, %arg11: memref<1x32x256xbf16, #tpu.memory_space<vmem>>, %arg12: memref<1x32x256xbf16, #tpu.memory_space<vmem>>) attributes {dimension_semantics = [#tpu.dimension_semantics<parallel>, #tpu.dimension_semantics<parallel>], iteration_bounds = array<i64: 2, 9>, scalar_prefetch = 0 : i64, scratch_operands = 0 : i64, tpu.core_type = #tpu.core_type<tc>, window_params = [{transform_indices = @transform_0, window_bounds = array<i64: 1, 32, 256>}, {transform_indices = @transform_1, window_bounds = array<i64: 1, 32, 256>}, {pipeline_mode = #tpu.pipeline_mode<synchronous>, transform_indices = @transform_2, window_bounds = array<i64: 32, 32>}, {pipeline_mode = #tpu.pipeline_mode<synchronous>, transform_indices = @transform_3, window_bounds = array<i64: 32, 1>}, {pipeline_mode = #tpu.pipeline_mode<synchronous>, transform_indices = @transform_4, window_bounds = array<i64: 32, 32>}, {pipeline_mode = #tpu.pipeline_mode<synchronous>, transform_indices = @transform_5, window_bounds = array<i64: 32, 1>}, {pipeline_mode = #tpu.pipeline_mode<synchronous>, transform_indices = @transform_6, window_bounds = array<i64: 32, 32>}, {pipeline_mode = #tpu.pipeline_mode<synchronous>, transform_indices = @transform_7, window_bounds = array<i64: 32, 1>}, {transform_indices = @transform_8, window_bounds = array<i64: 1, 32, 256>}, {transform_indices = @transform_9, window_bounds = array<i64: 1, 32, 256>}, {transform_indices = @transform_10, window_bounds = array<i64: 1, 32, 256>}]} {
    %c0 = arith.constant 0 : index
    %c0_0 = arith.constant 0 : index
    %c0_1 = arith.constant 0 : index
    %0 = vector.load %arg2[%c0, %c0_0, %c0_1] : memref<1x32x256xf32, #tpu.memory_space<vmem>>, vector<1x32x256xf32>
    %1 = vector.shape_cast %0 : vector<1x32x256xf32> to vector<32x256xf32>
    %2 = arith.truncf %1 : vector<32x256xf32> to vector<32x256xbf16>
    %c0_2 = arith.constant 0 : index
    %c0_3 = arith.constant 0 : index
    %c0_4 = arith.constant 0 : index
    %3 = vector.load %arg3[%c0_2, %c0_3, %c0_4] : memref<1x32x256xf32, #tpu.memory_space<vmem>>, vector<1x32x256xf32>
    %4 = vector.shape_cast %3 : vector<1x32x256xf32> to vector<32x256xf32>
    %5 = arith.truncf %4 : vector<32x256xf32> to vector<32x256xbf16>
    %c0_5 = arith.constant 0 : index
    %c0_6 = arith.constant 0 : index
    %6 = vector.load %arg4[%c0_5, %c0_6] : memref<32x32xbf16, #tpu.memory_space<vmem>>, vector<32x32xbf16>
    %cst = arith.constant dense<0.000000e+00> : vector<32x256xf32>
    %7 = tpu.matmul %6, %2, %cst {dimension_numbers = #tpu.dot_dimension_numbers<[1], [0], [0], [1], [0, 0, 1, 1], [], []>} : vector<32x32xbf16>, vector<32x256xbf16>, vector<32x256xf32> -> vector<32x256xf32>
    %c0_7 = arith.constant 0 : index
    %c0_8 = arith.constant 0 : index
    %8 = vector.load %arg5[%c0_7, %c0_8] : memref<32x1xf32, #tpu.memory_space<vmem>>, vector<32x1xf32>
    %9 = vector.broadcast %8 : vector<32x1xf32> to vector<32x256xf32>
    %10 = arith.addf %7, %9 : vector<32x256xf32>
    %cst_9 = arith.constant 0.000000e+00 : f32
    %11 = vector.broadcast %cst_9 : f32 to vector<32x256xf32>
    %12 = arith.maximumf %10, %11 : vector<32x256xf32>
    %13 = arith.truncf %12 : vector<32x256xf32> to vector<32x256xbf16>
    %c0_10 = arith.constant 0 : index
    %c0_11 = arith.constant 0 : index
    %c0_12 = arith.constant 0 : index
    %14 = vector.load %arg10[%c0_10, %c0_11, %c0_12] : memref<1x32x256xbf16, #tpu.memory_space<vmem>>, vector<1x32x256xbf16>
    %15 = vector.shape_cast %14 : vector<1x32x256xbf16> to vector<32x256xbf16>
    %16 = vector.shape_cast %13 : vector<32x256xbf16> to vector<1x32x256xbf16>
    tpu.vector_store %arg10[%c0_10, %c0_11, %c0_12], %16 {strides = array<i32>} : memref<1x32x256xbf16, #tpu.memory_space<vmem>>, vector<1x32x256xbf16>,
    %c0_13 = arith.constant 0 : index
    %c0_14 = arith.constant 0 : index
    %17 = vector.load %arg6[%c0_13, %c0_14] : memref<32x32xbf16, #tpu.memory_space<vmem>>, vector<32x32xbf16>
    %cst_15 = arith.constant dense<0.000000e+00> : vector<32x256xf32>
    %18 = tpu.matmul %17, %2, %cst_15 {dimension_numbers = #tpu.dot_dimension_numbers<[1], [0], [0], [1], [0, 0, 1, 1], [], []>} : vector<32x32xbf16>, vector<32x256xbf16>, vector<32x256xf32> -> vector<32x256xf32>
    %c0_16 = arith.constant 0 : index
    %c0_17 = arith.constant 0 : index
    %19 = vector.load %arg7[%c0_16, %c0_17] : memref<32x1xf32, #tpu.memory_space<vmem>>, vector<32x1xf32>
    %20 = vector.broadcast %19 : vector<32x1xf32> to vector<32x256xf32>
    %21 = arith.addf %18, %20 : vector<32x256xf32>
    %cst_18 = arith.constant 0.000000e+00 : f32
    %22 = vector.broadcast %cst_18 : f32 to vector<32x256xf32>
    %23 = arith.maximumf %21, %22 : vector<32x256xf32>
    %24 = arith.truncf %23 : vector<32x256xf32> to vector<32x256xbf16>
    %c0_19 = arith.constant 0 : index
    %c0_20 = arith.constant 0 : index
    %c0_21 = arith.constant 0 : index
    %25 = vector.load %arg11[%c0_19, %c0_20, %c0_21] : memref<1x32x256xbf16, #tpu.memory_space<vmem>>, vector<1x32x256xbf16>
    %26 = vector.shape_cast %25 : vector<1x32x256xbf16> to vector<32x256xbf16>
    %27 = vector.shape_cast %24 : vector<32x256xbf16> to vector<1x32x256xbf16>
    tpu.vector_store %arg11[%c0_19, %c0_20, %c0_21], %27 {strides = array<i32>} : memref<1x32x256xbf16, #tpu.memory_space<vmem>>, vector<1x32x256xbf16>,
    %c0_22 = arith.constant 0 : index
    %c0_23 = arith.constant 0 : index
    %28 = vector.load %arg8[%c0_22, %c0_23] : memref<32x32xbf16, #tpu.memory_space<vmem>>, vector<32x32xbf16>
    %cst_24 = arith.constant dense<0.000000e+00> : vector<32x256xf32>
    %29 = tpu.matmul %28, %5, %cst_24 {dimension_numbers = #tpu.dot_dimension_numbers<[1], [0], [0], [1], [0, 0, 1, 1], [], []>} : vector<32x32xbf16>, vector<32x256xbf16>, vector<32x256xf32> -> vector<32x256xf32>
    %c0_25 = arith.constant 0 : index
    %c0_26 = arith.constant 0 : index
    %30 = vector.load %arg9[%c0_25, %c0_26] : memref<32x1xf32, #tpu.memory_space<vmem>>, vector<32x1xf32>
    %31 = vector.broadcast %30 : vector<32x1xf32> to vector<32x256xf32>
    %32 = arith.addf %29, %31 : vector<32x256xf32>
    %cst_27 = arith.constant 0.000000e+00 : f32
    %33 = vector.broadcast %cst_27 : f32 to vector<32x256xf32>
    %34 = arith.maximumf %32, %33 : vector<32x256xf32>
    %35 = arith.truncf %34 : vector<32x256xf32> to vector<32x256xbf16>
    %c0_28 = arith.constant 0 : index
    %c0_29 = arith.constant 0 : index
    %c0_30 = arith.constant 0 : index
    %36 = vector.load %arg12[%c0_28, %c0_29, %c0_30] : memref<1x32x256xbf16, #tpu.memory_space<vmem>>, vector<1x32x256xbf16>
    %37 = vector.shape_cast %36 : vector<1x32x256xbf16> to vector<32x256xbf16>
    %38 = vector.shape_cast %35 : vector<32x256xbf16> to vector<1x32x256xbf16>
    tpu.vector_store %arg12[%c0_28, %c0_29, %c0_30], %38 {strides = array<i32>} : memref<1x32x256xbf16, #tpu.memory_space<vmem>>, vector<1x32x256xbf16>,
    return
  }
  func.func @transform_0(%arg0: i32, %arg1: i32) -> (i32, i32, i32) {
    %c0_i32 = arith.constant 0 : i32
    %c0_i32_0 = arith.constant 0 : i32
    return %arg0, %c0_i32, %arg1 : i32, i32, i32
  }
  func.func @transform_1(%arg0: i32, %arg1: i32) -> (i32, i32, i32) {
    %c0_i32 = arith.constant 0 : i32
    %c0_i32_0 = arith.constant 0 : i32
    return %arg0, %c0_i32, %arg1 : i32, i32, i32
  }
  func.func @transform_2(%arg0: i32, %arg1: i32) -> (i32, i32) {
    %c0_i32 = arith.constant 0 : i32
    %c0_i32_0 = arith.constant 0 : i32
    %c0_i32_1 = arith.constant 0 : i32
    return %c0_i32, %c0_i32_0 : i32, i32
  }
  func.func @transform_3(%arg0: i32, %arg1: i32) -> (i32, i32) {
    %c0_i32 = arith.constant 0 : i32
    %c0_i32_0 = arith.constant 0 : i32
    %c0_i32_1 = arith.constant 0 : i32
    return %c0_i32, %c0_i32_0 : i32, i32
  }
  func.func @transform_4(%arg0: i32, %arg1: i32) -> (i32, i32) {
    %c0_i32 = arith.constant 0 : i32
    %c0_i32_0 = arith.constant 0 : i32
    %c0_i32_1 = arith.constant 0 : i32
    return %c0_i32, %c0_i32_0 : i32, i32
  }
  func.func @transform_5(%arg0: i32, %arg1: i32) -> (i32, i32) {
    %c0_i32 = arith.constant 0 : i32
    %c0_i32_0 = arith.constant 0 : i32
    %c0_i32_1 = arith.constant 0 : i32
    return %c0_i32, %c0_i32_0 : i32, i32
  }
  func.func @transform_6(%arg0: i32, %arg1: i32) -> (i32, i32) {
    %c0_i32 = arith.constant 0 : i32
    %c0_i32_0 = arith.constant 0 : i32
    %c0_i32_1 = arith.constant 0 : i32
    return %c0_i32, %c0_i32_0 : i32, i32
  }
  func.func @transform_7(%arg0: i32, %arg1: i32) -> (i32, i32) {
    %c0_i32 = arith.constant 0 : i32
    %c0_i32_0 = arith.constant 0 : i32
    %c0_i32_1 = arith.constant 0 : i32
    return %c0_i32, %c0_i32_0 : i32, i32
  }
  func.func @transform_8(%arg0: i32, %arg1: i32) -> (i32, i32, i32) {
    %c0_i32 = arith.constant 0 : i32
    %c0_i32_0 = arith.constant 0 : i32
    return %arg0, %c0_i32, %arg1 : i32, i32, i32
  }
  func.func @transform_9(%arg0: i32, %arg1: i32) -> (i32, i32, i32) {
    %c0_i32 = arith.constant 0 : i32
    %c0_i32_0 = arith.constant 0 : i32
    return %arg0, %c0_i32, %arg1 : i32, i32, i32
  }
  func.func @transform_10(%arg0: i32, %arg1: i32) -> (i32, i32, i32) {
    %c0_i32 = arith.constant 0 : i32
    %c0_i32_0 = arith.constant 0 : i32
    return %arg0, %c0_i32, %arg1 : i32, i32, i32
  }
}

</mosaic_0001>

<llo_original>
// kernel: tpu_custom_call.1
$region0: #{tpu_custom_call.1}
  #allocation0 [shape = 'u32[]', space=smem, size = 0x4, offset = 0x4, fixed_abs, tag = 'smem constant byte address 0x4 - core index']
  #allocation1 [shape = 'u32[72,128]{1,0:T(1,128)}', space=vmem, size = 0x9000, scoped, tag = 'internal scratch']
  %s0 = inlined_call_operand.hbm [shape: f32[2,32,2304], index: 0, kind: input, shape index: {}]
  %s1 = inlined_call_operand.hbm [shape: f32[2,32,2304], index: 1, kind: input, shape index: {}]
  %s2 = inlined_call_operand.vmem [shape: bf16[32,32], index: 2, kind: input, shape index: {}]
  %s3 = inlined_call_operand.vmem [shape: f32[32,1], index: 3, kind: input, shape index: {}]
  %s4 = inlined_call_operand.vmem [shape: bf16[32,32], index: 4, kind: input, shape index: {}]
  %s5 = inlined_call_operand.vmem [shape: f32[32,1], index: 5, kind: input, shape index: {}]
  %s6 = inlined_call_operand.vmem [shape: bf16[32,32], index: 6, kind: input, shape index: {}]
  %s7 = inlined_call_operand.vmem [shape: f32[32,1], index: 7, kind: input, shape index: {}]
  %s8 = inlined_call_operand.hbm [shape: bf16[2,32,2304], index: 8, kind: output, shape index: {0}]
  %s9 = inlined_call_operand.hbm [shape: bf16[2,32,2304], index: 9, kind: output, shape index: {1}]
  %s10 = inlined_call_operand.hbm [shape: bf16[2,32,2304], index: 10, kind: output, shape index: {2}]
  %11 = xla_tuple %s8, %s9, %s10
  %s12 = sld [smem:[#allocation0]]
  $region89: #{tpu_custom_call.1} parent=0
    _
  %s14 = ssub.s32 1, %s12
  %s15 = scalar_select 0, %s14, %s12
  $region1: #{tpu_custom_call.1} parent=0
    #allocation2 [shape = 'u8[65536]{0}', space=vmem, size = 0x10000, scoped, tag = 'input window, operand 0']
    #allocation3 [shape = 's32[2]{0}', space=sflag, size = 0x8, scoped, tag = 'scoped memory for tpu_custom_call.1']
    #allocation4 [shape = 's32[2]{0}', space=sflag, size = 0x8, scoped, tag = 'scoped memory for tpu_custom_call.1']
    #allocation5 [shape = 'u8[65536]{0}', space=vmem, size = 0x10000, scoped, tag = 'input window, operand 1']
    #allocation6 [shape = 's32[2]{0}', space=sflag, size = 0x8, scoped, tag = 'scoped memory for tpu_custom_call.1']
    #allocation7 [shape = 'u8[32768]{0}', space=vmem, size = 0x8000, scoped, tag = 'output window, operand 0']
    #allocation8 [shape = 'u8[32768]{0}', space=vmem, size = 0x8000, scoped, tag = 'output window, operand 1']
    #allocation9 [shape = 's32[2]{0}', space=sflag, size = 0x8, scoped, tag = 'scoped memory for tpu_custom_call.1']
    #allocation10 [shape = 'u8[32768]{0}', space=vmem, size = 0x8000, scoped, tag = 'output window, operand 2']
    %16 = vsyncpa [#allocation3], 0
    %s17 = scalar_lea.sflag [#allocation3], 1
    %18 = vsyncpa %s17, 0
    %19 = vsyncpa [#allocation6], 0
    %s20 = scalar_lea.sflag [#allocation6], 1
    %21 = vsyncpa %s20, 0
    %22 = vsyncpa [#allocation4], 0
    %s23 = scalar_lea.sflag [#allocation4], 1
    %24 = vsyncpa %s23, 0
    %25 = vsyncpa [#allocation9], 0
    %s26 = scalar_lea.sflag [#allocation9], 1
    %27 = vsyncpa %s26, 0
    loop: start=0, step=1, limit=20
    $region2: #{tpu_custom_call.1} parent=1 // loop_pre_header
      _
    $region3: #{tpu_custom_call.1} parent=1 // loop_header
      %s29 = sphi 0, %s33
      %p30 = scmp.ge.s32.totalorder %s29, 20
      %s36 = sphi 0, %s48
      %s37 = sphi 0, %s44
      %s38 = sphi 0, %s36
      %s39 = sphi 0, %s37
      %s40 = sphi 0, %s38
      %s41 = sphi 0, %s39
      %s53 = sphi 0, %s55
      %s56 = sphi 0, %s53
      %s57 = sphi 0, %s56
      %s73 = sphi 0, %s57
      %s81 = sphi 0, %s83
      %s84 = sphi 0, %s81
      %s85 = sphi 0, %s84
      %s101 = sphi 0, %s85
      %s105 = sphi 0, %s105
      %s107 = sphi 0, %s105
      %s108 = sphi 0, %s107
      %s122 = sphi 0, %s108
      %s126 = sphi 0, %s126
      %s128 = sphi 0, %s126
      %s129 = sphi 0, %s128
      %s143 = sphi 0, %s129
      %s147 = sphi 0, %s147
      %s149 = sphi 0, %s147
      %s150 = sphi 0, %s149
      %s164 = sphi 0, %s150
      %s168 = sphi 0, %s168
      %s170 = sphi 0, %s168
      %s171 = sphi 0, %s170
      %s185 = sphi 0, %s171
      %s189 = sphi 0, %s189
      %s191 = sphi 0, %s189
      %s192 = sphi 0, %s191
      %s206 = sphi 0, %s192
      %s210 = sphi 0, %s210
      %s212 = sphi 0, %s210
      %s213 = sphi 0, %s212
      %s227 = sphi 0, %s213
      %s235 = sphi 0, %s237
      %s238 = sphi 0, %s235
      %s239 = sphi 0, %s238
      %s255 = sphi 0, %s239
      %s263 = sphi 0, %s265
      %s266 = sphi 0, %s263
      %s267 = sphi 0, %s266
      %s283 = sphi 0, %s267
      %s291 = sphi 0, %s293
      %s294 = sphi 0, %s291
      %s295 = sphi 0, %s294
      %s311 = sphi 0, %s295
    $region4: #{tpu_custom_call.1} parent=1 // loop_header_branch
      %32 = sbr.rel (%p30) target = $region8
    $region5: #{tpu_custom_call.1} parent=1 // loop_body
      %s34 = ssub.s32 %s29, 1
      %s35 = ssub.s32 %s29, 2
      %s42 = sadd.s32 1, %s37
      %p43 = scmp.ge.s32.totalorder %s42, 9
      %s44 = scalar_select %p43, 0, %s42
      %s45 = sadd.s32 1, %s36
      %s46 = scalar_select %p43, %s45, %s36
      %p47 = scmp.ge.s32.totalorder %s46, 2
      %s48 = scalar_select %p47, 0, %s46
      %s49 = ssub.s32 %s36, %s48
      %s50 = ssub.s32 %s37, %s44
      %s51 = sor.u32 %s49, %s50
      %p52 = scmp.eq.s32.totalorder %s51, 0
      %s54 = sadd.s32 %s53, 1
      %s55 = scalar_select %p52, %s53, %s54
      %p58 = pneg %p52
      %p59 = scmp.eq.s32.totalorder %s29, 17
      %p60 = por %p58, %p59
      %p61 = scmp.ne.s32.totalorder %s53, %s56
      %p62 = scmp.eq.s32.totalorder %s29, 0
      %p63 = por %p61, %p62
      %p64 = scmp.ne.s32.totalorder %s53, %s56
      %p65 = scmp.eq.s32.totalorder %s34, 17
      %p66 = por %p64, %p65
      %p67 = scmp.ne.s32.totalorder %s56, %s57
      %p68 = scmp.eq.s32.totalorder %s34, 0
      %p69 = por %p67, %p68
      %p70 = scmp.ne.s32.totalorder %s56, %s57
      %p71 = scmp.eq.s32.totalorder %s35, 17
      %p72 = por %p70, %p71
      %p74 = scmp.ne.s32.totalorder %s57, %s73
      %p75 = scmp.eq.s32.totalorder %s35, 0
      %p76 = por %p74, %p75
      %s77 = ssub.s32 %s36, %s48
      %s78 = ssub.s32 %s37, %s44
      %s79 = sor.u32 %s77, %s78
      %p80 = scmp.eq.s32.totalorder %s79, 0
      %s82 = sadd.s32 %s81, 1
      %s83 = scalar_select %p80, %s81, %s82
      %p86 = pneg %p80
      %p87 = scmp.eq.s32.totalorder %s29, 17
      %p88 = por %p86, %p87
      %p89 = scmp.ne.s32.totalorder %s81, %s84
      %p90 = scmp.eq.s32.totalorder %s29, 0
      %p91 = por %p89, %p90
      %p92 = scmp.ne.s32.totalorder %s81, %s84
      %p93 = scmp.eq.s32.totalorder %s34, 17
      %p94 = por %p92, %p93
      %p95 = scmp.ne.s32.totalorder %s84, %s85
      %p96 = scmp.eq.s32.totalorder %s34, 0
      %p97 = por %p95, %p96
      %p98 = scmp.ne.s32.totalorder %s84, %s85
      %p99 = scmp.eq.s32.totalorder %s35, 17
      %p100 = por %p98, %p99
      %p102 = scmp.ne.s32.totalorder %s85, %s101
      %p103 = scmp.eq.s32.totalorder %s35, 0
      %p104 = por %p102, %p103
      %s106 = sadd.s32 %s105, 1
      %p109 = scmp.eq.s32.totalorder %s29, 17
      %p110 = scmp.ne.s32.totalorder %s105, %s107
      %p111 = scmp.eq.s32.totalorder %s29, 0
      %p112 = por %p110, %p111
      %p113 = scmp.ne.s32.totalorder %s105, %s107
      %p114 = scmp.eq.s32.totalorder %s34, 17
      %p115 = por %p113, %p114
      %p116 = scmp.ne.s32.totalorder %s107, %s108
      %p117 = scmp.eq.s32.totalorder %s34, 0
      %p118 = por %p116, %p117
      %p119 = scmp.ne.s32.totalorder %s107, %s108
      %p120 = scmp.eq.s32.totalorder %s35, 17
      %p121 = por %p119, %p120
      %p123 = scmp.ne.s32.totalorder %s108, %s122
      %p124 = scmp.eq.s32.totalorder %s35, 0
      %p125 = por %p123, %p124
      %s127 = sadd.s32 %s126, 1
      %p130 = scmp.eq.s32.totalorder %s29, 17
      %p131 = scmp.ne.s32.totalorder %s126, %s128
      %p132 = scmp.eq.s32.totalorder %s29, 0
      %p133 = por %p131, %p132
      %p134 = scmp.ne.s32.totalorder %s126, %s128
      %p135 = scmp.eq.s32.totalorder %s34, 17
      %p136 = por %p134, %p135
      %p137 = scmp.ne.s32.totalorder %s128, %s129
      %p138 = scmp.eq.s32.totalorder %s34, 0
      %p139 = por %p137, %p138
      %p140 = scmp.ne.s32.totalorder %s128, %s129
      %p141 = scmp.eq.s32.totalorder %s35, 17
      %p142 = por %p140, %p141
      %p144 = scmp.ne.s32.totalorder %s129, %s143
      %p145 = scmp.eq.s32.totalorder %s35, 0
      %p146 = por %p144, %p145
      %s148 = sadd.s32 %s147, 1
      %p151 = scmp.eq.s32.totalorder %s29, 17
      %p152 = scmp.ne.s32.totalorder %s147, %s149
      %p153 = scmp.eq.s32.totalorder %s29, 0
      %p154 = por %p152, %p153
      %p155 = scmp.ne.s32.totalorder %s147, %s149
      %p156 = scmp.eq.s32.totalorder %s34, 17
      %p157 = por %p155, %p156
      %p158 = scmp.ne.s32.totalorder %s149, %s150
      %p159 = scmp.eq.s32.totalorder %s34, 0
      %p160 = por %p158, %p159
      %p161 = scmp.ne.s32.totalorder %s149, %s150
      %p162 = scmp.eq.s32.totalorder %s35, 17
      %p163 = por %p161, %p162
      %p165 = scmp.ne.s32.totalorder %s150, %s164
      %p166 = scmp.eq.s32.totalorder %s35, 0
      %p167 = por %p165, %p166
      %s169 = sadd.s32 %s168, 1
      %p172 = scmp.eq.s32.totalorder %s29, 17
      %p173 = scmp.ne.s32.totalorder %s168, %s170
      %p174 = scmp.eq.s32.totalorder %s29, 0
      %p175 = por %p173, %p174
      %p176 = scmp.ne.s32.totalorder %s168, %s170
      %p177 = scmp.eq.s32.totalorder %s34, 17
      %p178 = por %p176, %p177
      %p179 = scmp.ne.s32.totalorder %s170, %s171
      %p180 = scmp.eq.s32.totalorder %s34, 0
      %p181 = por %p179, %p180
      %p182 = scmp.ne.s32.totalorder %s170, %s171
      %p183 = scmp.eq.s32.totalorder %s35, 17
      %p184 = por %p182, %p183
      %p186 = scmp.ne.s32.totalorder %s171, %s185
      %p187 = scmp.eq.s32.totalorder %s35, 0
      %p188 = por %p186, %p187
      %s190 = sadd.s32 %s189, 1
      %p193 = scmp.eq.s32.totalorder %s29, 17
      %p194 = scmp.ne.s32.totalorder %s189, %s191
      %p195 = scmp.eq.s32.totalorder %s29, 0
      %p196 = por %p194, %p195
      %p197 = scmp.ne.s32.totalorder %s189, %s191
      %p198 = scmp.eq.s32.totalorder %s34, 17
      %p199 = por %p197, %p198
      %p200 = scmp.ne.s32.totalorder %s191, %s192
      %p201 = scmp.eq.s32.totalorder %s34, 0
      %p202 = por %p200, %p201
      %p203 = scmp.ne.s32.totalorder %s191, %s192
      %p204 = scmp.eq.s32.totalorder %s35, 17
      %p205 = por %p203, %p204
      %p207 = scmp.ne.s32.totalorder %s192, %s206
      %p208 = scmp.eq.s32.totalorder %s35, 0
      %p209 = por %p207, %p208
      %s211 = sadd.s32 %s210, 1
      %p214 = scmp.eq.s32.totalorder %s29, 17
      %p215 = scmp.ne.s32.totalorder %s210, %s212
      %p216 = scmp.eq.s32.totalorder %s29, 0
      %p217 = por %p215, %p216
      %p218 = scmp.ne.s32.totalorder %s210, %s212
      %p219 = scmp.eq.s32.totalorder %s34, 17
      %p220 = por %p218, %p219
      %p221 = scmp.ne.s32.totalorder %s212, %s213
      %p222 = scmp.eq.s32.totalorder %s34, 0
      %p223 = por %p221, %p222
      %p224 = scmp.ne.s32.totalorder %s212, %s213
      %p225 = scmp.eq.s32.totalorder %s35, 17
      %p226 = por %p224, %p225
      %p228 = scmp.ne.s32.totalorder %s213, %s227
      %p229 = scmp.eq.s32.totalorder %s35, 0
      %p230 = por %p228, %p229
      %s231 = ssub.s32 %s36, %s48
      %s232 = ssub.s32 %s37, %s44
      %s233 = sor.u32 %s231, %s232
      %p234 = scmp.eq.s32.totalorder %s233, 0
      %s236 = sadd.s32 %s235, 1
      %s237 = scalar_select %p234, %s235, %s236
      %p240 = pneg %p234
      %p241 = scmp.eq.s32.totalorder %s29, 17
      %p242 = por %p240, %p241
      %p243 = scmp.ne.s32.totalorder %s235, %s238
      %p244 = scmp.eq.s32.totalorder %s29, 0
      %p245 = por %p243, %p244
      %p246 = scmp.ne.s32.totalorder %s235, %s238
      %p247 = scmp.eq.s32.totalorder %s34, 17
      %p248 = por %p246, %p247
      %p249 = scmp.ne.s32.totalorder %s238, %s239
      %p250 = scmp.eq.s32.totalorder %s34, 0
      %p251 = por %p249, %p250
      %p252 = scmp.ne.s32.totalorder %s238, %s239
      %p253 = scmp.eq.s32.totalorder %s35, 17
      %p254 = por %p252, %p253
      %p256 = scmp.ne.s32.totalorder %s239, %s255
      %p257 = scmp.eq.s32.totalorder %s35, 0
      %p258 = por %p256, %p257
      %s259 = ssub.s32 %s36, %s48
      %s260 = ssub.s32 %s37, %s44
      %s261 = sor.u32 %s259, %s260
      %p262 = scmp.eq.s32.totalorder %s261, 0
      %s264 = sadd.s32 %s263, 1
      %s265 = scalar_select %p262, %s263, %s264
      %p268 = pneg %p262
      %p269 = scmp.eq.s32.totalorder %s29, 17
      %p270 = por %p268, %p269
      %p271 = scmp.ne.s32.totalorder %s263, %s266
      %p272 = scmp.eq.s32.totalorder %s29, 0
      %p273 = por %p271, %p272
      %p274 = scmp.ne.s32.totalorder %s263, %s266
      %p275 = scmp.eq.s32.totalorder %s34, 17
      %p276 = por %p274, %p275
      %p277 = scmp.ne.s32.totalorder %s266, %s267
      %p278 = scmp.eq.s32.totalorder %s34, 0
      %p279 = por %p277, %p278
      %p280 = scmp.ne.s32.totalorder %s266, %s267
      %p281 = scmp.eq.s32.totalorder %s35, 17
      %p282 = por %p280, %p281
      %p284 = scmp.ne.s32.totalorder %s267, %s283
      %p285 = scmp.eq.s32.totalorder %s35, 0
      %p286 = por %p284, %p285
      %s287 = ssub.s32 %s36, %s48
      %s288 = ssub.s32 %s37, %s44
      %s289 = sor.u32 %s287, %s288
      %p290 = scmp.eq.s32.totalorder %s289, 0
      %s292 = sadd.s32 %s291, 1
      %s293 = scalar_select %p290, %s291, %s292
      %p296 = pneg %p290
      %p297 = scmp.eq.s32.totalorder %s29, 17
      %p298 = por %p296, %p297
      %p299 = scmp.ne.s32.totalorder %s291, %s294
      %p300 = scmp.eq.s32.totalorder %s29, 0
      %p301 = por %p299, %p300
      %p302 = scmp.ne.s32.totalorder %s291, %s294
      %p303 = scmp.eq.s32.totalorder %s34, 17
      %p304 = por %p302, %p303
      %p305 = scmp.ne.s32.totalorder %s294, %s295
      %p306 = scmp.eq.s32.totalorder %s34, 0
      %p307 = por %p305, %p306
      %p308 = scmp.ne.s32.totalorder %s294, %s295
      %p309 = scmp.eq.s32.totalorder %s35, 17
      %p310 = por %p308, %p309
      %p312 = scmp.ne.s32.totalorder %s295, %s311
      %p313 = scmp.eq.s32.totalorder %s35, 0
      %p314 = por %p312, %p313
      %p315 = scmp.le.s32.totalorder 1, %s29
      %p316 = scmp.lt.s32.totalorder %s29, 19
      %p317 = pnand %p315, %p316
      %p318 = pneg %p317
      // Predicated region
      $region9: #{tpu_custom_call.1} parent=5 // pred_check
        _
      $region10: #{tpu_custom_call.1} parent=5 // pred_check_branch
        %320 = sbr.rel (%p317) target = $region12
      $region11: #{tpu_custom_call.1} parent=5 // pred_region
        %s321 = ssub.s32 %s29, 1
        // Predicated region
        $region13: #{tpu_custom_call.1} parent=11 // pred_check
          %p322 = pneg %p118
        $region14: #{tpu_custom_call.1} parent=11 // pred_check_branch
          %324 = sbr.rel (%p322) target = $region16
        $region15: #{tpu_custom_call.1} parent=11 // pred_region
          _
        $region16: #{tpu_custom_call.1} parent=11 // pred_fallthru
          _
        // Predicated region
        $region17: #{tpu_custom_call.1} parent=11 // pred_check
          %p325 = pneg %p139
        $region18: #{tpu_custom_call.1} parent=11 // pred_check_branch
          %327 = sbr.rel (%p325) target = $region20
        $region19: #{tpu_custom_call.1} parent=11 // pred_region
          _
        $region20: #{tpu_custom_call.1} parent=11 // pred_fallthru
          _
        // Predicated region
        $region21: #{tpu_custom_call.1} parent=11 // pred_check
          %p328 = pneg %p160
        $region22: #{tpu_custom_call.1} parent=11 // pred_check_branch
          %330 = sbr.rel (%p328) target = $region24
        $region23: #{tpu_custom_call.1} parent=11 // pred_region
          _
        $region24: #{tpu_custom_call.1} parent=11 // pred_fallthru
          _
        // Predicated region
        $region25: #{tpu_custom_call.1} parent=11 // pred_check
          %p331 = pneg %p181
        $region26: #{tpu_custom_call.1} parent=11 // pred_check_branch
          %333 = sbr.rel (%p331) target = $region28
        $region27: #{tpu_custom_call.1} parent=11 // pred_region
          _
        $region28: #{tpu_custom_call.1} parent=11 // pred_fallthru
          _
        // Predicated region
        $region29: #{tpu_custom_call.1} parent=11 // pred_check
          %p334 = pneg %p202
        $region30: #{tpu_custom_call.1} parent=11 // pred_check_branch
          %336 = sbr.rel (%p334) target = $region32
        $region31: #{tpu_custom_call.1} parent=11 // pred_region
          _
        $region32: #{tpu_custom_call.1} parent=11 // pred_fallthru
          _
        // Predicated region
        $region33: #{tpu_custom_call.1} parent=11 // pred_check
          %p337 = pneg %p223
        $region34: #{tpu_custom_call.1} parent=11 // pred_check_branch
          %339 = sbr.rel (%p337) target = $region36
        $region35: #{tpu_custom_call.1} parent=11 // pred_region
          _
        $region36: #{tpu_custom_call.1} parent=11 // pred_fallthru
          _
      $region12: #{tpu_custom_call.1} parent=5 // pred_fallthru
        _
      %p340 = scmp.lt.s32.totalorder %s29, 18
      // Predicated region
      $region37: #{tpu_custom_call.1} parent=5 // pred_check
        %p341 = pneg %p340
      $region38: #{tpu_custom_call.1} parent=5 // pred_check_branch
        %343 = sbr.rel (%p341) target = $region40
      $region39: #{tpu_custom_call.1} parent=5 // pred_region
        // Predicated region
        $region41: #{tpu_custom_call.1} parent=39 // pred_check
          %p344 = pneg %p63
        $region42: #{tpu_custom_call.1} parent=39 // pred_check_branch
          %346 = sbr.rel (%p344) target = $region44
        $region43: #{tpu_custom_call.1} parent=39 // pred_region
          %s347 = sand.u32 %s53, 1
          %s348 = scalar_lea.sflag [#allocation3], %s347
          %s349 = sand.u32 %s53, 1
          %s350 = smul.addr %s349, 64
          %s351 = scalar_lea.vmem [#allocation2], %s350
          %s352 = smul.u32 2, %s37
          %354 = vsyncadd %s348, 0
          %s355 = smul.addr %s36, 72
          %s356 = sadd.s32 %s352, %s355
          %s357 = smul.addr %s356, 8
          %s358 = scalar_lea.hbm %s0, %s357
          %s359 = sshll.u32 %s358, 4
          %s360 = int_to_ptr.hbm [resolvable:$true] %s359
          %s361 = sshll.u32 %s351, 4
          %s362 = int_to_ptr.vmem [resolvable:$true] %s361
          %367 = dma.hbm_to_vmem [thread:$0]  %s360, 1024, %s362, %s348, 2304, 256, 16
        $region44: #{tpu_custom_call.1} parent=39 // pred_fallthru
          _
        // Predicated region
        $region45: #{tpu_custom_call.1} parent=39 // pred_check
          %p368 = pneg %p91
        $region46: #{tpu_custom_call.1} parent=39 // pred_check_branch
          %370 = sbr.rel (%p368) target = $region48
        $region47: #{tpu_custom_call.1} parent=39 // pred_region
          %s371 = sand.u32 %s81, 1
          %s372 = scalar_lea.sflag [#allocation6], %s371
          %s373 = sand.u32 %s81, 1
          %s374 = smul.addr %s373, 64
          %s375 = scalar_lea.vmem [#allocation5], %s374
          %s376 = smul.u32 2, %s37
          %378 = vsyncadd %s372, 0
          %s379 = smul.addr %s36, 72
          %s380 = sadd.s32 %s376, %s379
          %s381 = smul.addr %s380, 8
          %s382 = scalar_lea.hbm %s1, %s381
          %s383 = sshll.u32 %s382, 4
          %s384 = int_to_ptr.hbm [resolvable:$true] %s383
          %s385 = sshll.u32 %s375, 4
          %s386 = int_to_ptr.vmem [resolvable:$true] %s385
          %391 = dma.hbm_to_vmem [thread:$0]  %s384, 1024, %s386, %s372, 2304, 256, 16
        $region48: #{tpu_custom_call.1} parent=39 // pred_fallthru
          _
      $region40: #{tpu_custom_call.1} parent=5 // pred_fallthru
        _
      %p392 = scmp.le.s32.totalorder 1, %s29
      %p393 = scmp.lt.s32.totalorder %s29, 19
      %p394 = pnand %p392, %p393
      %p395 = pneg %p394
      // Predicated region
      $region49: #{tpu_custom_call.1} parent=5 // pred_check
        _
      $region50: #{tpu_custom_call.1} parent=5 // pred_check_branch
        %397 = sbr.rel (%p394) target = $region52
      $region51: #{tpu_custom_call.1} parent=5 // pred_region
        %s398 = ssub.s32 %s29, 1
        %s399 = sand.u32 %s56, 1
        %s400 = scalar_lea.sflag [#allocation3], %s399
        %s401 = sand.u32 %s56, 1
        %s402 = smul.addr %s401, 64
        %s403 = scalar_lea.vmem [#allocation2], %s402
        // Predicated region
        $region53: #{tpu_custom_call.1} parent=51 // pred_check
          %p404 = pneg %p69
        $region54: #{tpu_custom_call.1} parent=51 // pred_check_branch
          %406 = sbr.rel (%p404) target = $region56
        $region55: #{tpu_custom_call.1} parent=51 // pred_region
          %408 = dma.done %s400, 1024
        $region56: #{tpu_custom_call.1} parent=51 // pred_fallthru
          _
        %s409 = sand.u32 %s84, 1
        %s410 = scalar_lea.sflag [#allocation6], %s409
        %s411 = sand.u32 %s84, 1
        %s412 = smul.addr %s411, 64
        %s413 = scalar_lea.vmem [#allocation5], %s412
        // Predicated region
        $region57: #{tpu_custom_call.1} parent=51 // pred_check
          %p414 = pneg %p97
        $region58: #{tpu_custom_call.1} parent=51 // pred_check_branch
          %416 = sbr.rel (%p414) target = $region60
        $region59: #{tpu_custom_call.1} parent=51 // pred_region
          %418 = dma.done %s410, 1024
        $region60: #{tpu_custom_call.1} parent=51 // pred_fallthru
          _
        %s419 = sand.u32 %s56, 1
        %s420 = scalar_lea.sflag [#allocation3], %s419
        %s421 = sand.u32 %s56, 1
        %s422 = smul.addr %s421, 64
        %s423 = scalar_lea.vmem [#allocation2], %s422
        %p424 = pneg %p69
        %p425 = pneg %p66
        %s426 = sand.u32 %s84, 1
        %s427 = scalar_lea.sflag [#allocation6], %s426
        %s428 = sand.u32 %s84, 1
        %s429 = smul.addr %s428, 64
        %s430 = scalar_lea.vmem [#allocation5], %s429
        %p431 = pneg %p97
        %p432 = pneg %p94
        %p433 = pneg %p118
        %p434 = pneg %p115
        %p435 = pneg %p139
        %p436 = pneg %p136
        %p437 = pneg %p160
        %p438 = pneg %p157
        %p439 = pneg %p181
        %p440 = pneg %p178
        %p441 = pneg %p202
        %p442 = pneg %p199
        %p443 = pneg %p223
        %p444 = pneg %p220
        %p445 = pneg %p251
        %p446 = pneg %p248
        %s447 = sand.u32 %s238, 1
        %s448 = scalar_lea.sflag [#allocation4], %s447
        %s449 = sand.u32 %s238, 1
        %s450 = smul.addr %s449, 32
        %s451 = scalar_lea.vmem [#allocation7], %s450
        %p452 = pneg %p279
        %p453 = pneg %p276
        %s454 = sand.u32 %s34, 1
        %s455 = scalar_lea.sflag [#allocation9], %s454
        %s456 = sand.u32 %s266, 1
        %s457 = smul.addr %s456, 32
        %s458 = scalar_lea.vmem [#allocation8], %s457
        %p459 = pneg %p307
        %p460 = pneg %p304
        %s461 = sand.u32 %s34, 1
        %s462 = scalar_lea.sflag [#allocation9], %s461
        %s463 = sand.u32 %s294, 1
        %s464 = smul.addr %s463, 32
        %s465 = scalar_lea.vmem [#allocation10], %s464
        %s466 = smul.u32 2, %s39
        %s467 = smul.u32 2, %s39
        %s468 = smul.u32 2, %s39
        %s469 = smul.u32 2, %s39
        %s470 = smul.u32 2, %s39
        %v472 = vld [vmem:[%s403] sm:$0xff]
        %v473 = vld [vmem:[%s403 + $0x8] sm:$0xff]
        %v474 = vld [vmem:[%s403 + $0x10] sm:$0xff]
        %v475 = vld [vmem:[%s403 + $0x18] sm:$0xff]
        %v476 = vld [vmem:[%s403 + $0x20] sm:$0xff]
        %v477 = vld [vmem:[%s403 + $0x28] sm:$0xff]
        %v478 = vld [vmem:[%s403 + $0x30] sm:$0xff]
        %v479 = vld [vmem:[%s403 + $0x38] sm:$0xff]
        %v480 = vpack.c.bf16 %v474, %v472
        %v481 = vpack.c.bf16 %v475, %v473
        %v482 = vpack.c.bf16 %v478, %v476
        %v483 = vpack.c.bf16 %v479, %v477
        %v484 = vld [vmem:[%s413] sm:$0xff]
        %v485 = vld [vmem:[%s413 + $0x8] sm:$0xff]
        %v486 = vld [vmem:[%s413 + $0x10] sm:$0xff]
        %v487 = vld [vmem:[%s413 + $0x18] sm:$0xff]
        %v488 = vld [vmem:[%s413 + $0x20] sm:$0xff]
        %v489 = vld [vmem:[%s413 + $0x28] sm:$0xff]
        %v490 = vld [vmem:[%s413 + $0x30] sm:$0xff]
        %v491 = vld [vmem:[%s413 + $0x38] sm:$0xff]
        %v492 = vpack.c.bf16 %v486, %v484
        %v493 = vpack.c.bf16 %v487, %v485
        %v494 = vpack.c.bf16 %v490, %v488
        %v495 = vpack.c.bf16 %v491, %v489
        %v496 = vld [vmem:[%s2] sm:$0xf]
        %v497 = vld [vmem:[%s2 + $0x4] sm:$0xf]
        %v498 = vld [vmem:[%s2 + $0x8] sm:$0xf]
        %v499 = vld [vmem:[%s2 + $0xc] sm:$0xf]
        %v500 = vld [vmem:[%s3] sm:$0xff]
        %v501 = vld [vmem:[%s3 + $0x8] sm:$0xff]
        %v502 = vld [vmem:[%s3 + $0x10] sm:$0xff]
        %v503 = vld [vmem:[%s3 + $0x18] sm:$0xff]
        %505 = vset.pattern.permute.xlu0 0
        %506 = vperm.xlu0 %505, %v500
        %v507 = vpop.permute.xlu0 %506
        %510 = vset.pattern.permute.xlu0 0
        %511 = vperm.xlu0 %510, %v501
        %v512 = vpop.permute.xlu0 %511
        %515 = vset.pattern.permute.xlu0 0
        %516 = vperm.xlu0 %515, %v502
        %v517 = vpop.permute.xlu0 %516
        %520 = vset.pattern.permute.xlu0 0
        %521 = vperm.xlu0 %520, %v503
        %v522 = vpop.permute.xlu0 %521
        %v528 = vunpack.c.l.b16 %v496
        %v529 = vunpack.c.l.b16 %v497
        %v530 = vunpack.c.l.b16 %v498
        %v531 = vunpack.c.l.b16 %v499
        %v532 = vpack.c.b16 %v529, %v528
        %v533 = vpack.c.b16 %v531, %v530
        %vm534 = vcmask 261120
        %v536 = vsel %vm534, %v532, 0
        %v539 = vsel %vm534, %v533, 0
        %541 = vmatpush.bf16.msra.mxu0 0
        %542 = vmatpush.bf16.msra.mxu0 0
        %543 = vmatpush.bf16.msra.mxu0 0
        %544 = vmatpush.bf16.msra.mxu0 0
        %545 = vmatpush.bf16.msra.mxu0 0
        %546 = vmatpush.bf16.msra.mxu0 0
        %547 = vmatpush.bf16.msra.mxu0 %v482
        %548 = vmatpush.bf16.msra.mxu0 %v480
        %549 = vmatmul.bf16.gmra.mxu0 %v536
        %v550 = vpop.f32.mrf.mxu0
        %v551 = vadd.f32 %v507, %v550
        %v552 = vpop.f32.mrf.mxu0
        %v553 = vadd.f32 %v512, %v552
        %554 = vmatmul.bf16.gmra.mxu0 %v539
        %v555 = vpop.f32.mrf.mxu0
        %v556 = vadd.f32 %v517, %v555
        %v557 = vpop.f32.mrf.mxu0
        %v558 = vadd.f32 %v522, %v557
        %559 = vdwg.mxu0
        %560 = vmatpush.bf16.msra.mxu0 0
        %561 = vmatpush.bf16.msra.mxu0 0
        %562 = vmatpush.bf16.msra.mxu0 0
        %563 = vmatpush.bf16.msra.mxu0 0
        %564 = vmatpush.bf16.msra.mxu0 0
        %565 = vmatpush.bf16.msra.mxu0 0
        %566 = vmatpush.bf16.msra.mxu0 %v483
        %567 = vmatpush.bf16.msra.mxu0 %v481
        %568 = vmatmul.bf16.gmra.mxu0 %v536
        %v569 = vpop.f32.mrf.mxu0
        %v570 = vadd.f32 %v507, %v569
        %v571 = vpop.f32.mrf.mxu0
        %v572 = vadd.f32 %v512, %v571
        %573 = vmatmul.bf16.gmra.mxu0 %v539
        %v574 = vpop.f32.mrf.mxu0
        %v575 = vadd.f32 %v517, %v574
        %v576 = vpop.f32.mrf.mxu0
        %v577 = vadd.f32 %v522, %v576
        %578 = vdwg.mxu0
        %v579 = vmax.f32 %v551, 0.0
        %v580 = vmax.f32 %v570, 0.0
        %v581 = vmax.f32 %v553, 0.0
        %v582 = vmax.f32 %v572, 0.0
        %v583 = vmax.f32 %v556, 0.0
        %v584 = vmax.f32 %v575, 0.0
        %v585 = vmax.f32 %v558, 0.0
        %v586 = vmax.f32 %v577, 0.0
        %v587 = vpack.c.bf16 %v580, %v579
        %v588 = vpack.c.bf16 %v582, %v581
        %v589 = vpack.c.bf16 %v584, %v583
        %v590 = vpack.c.bf16 %v586, %v585
        %591 = vst [vmem:[%s451] sm:$0xff] %v587
        %592 = vst [vmem:[%s451 + $0x8] sm:$0xff] %v588
        %593 = vst [vmem:[%s451 + $0x10] sm:$0xff] %v589
        %594 = vst [vmem:[%s451 + $0x18] sm:$0xff] %v590
        %v595 = vld [vmem:[%s4] sm:$0xf]
        %v596 = vld [vmem:[%s4 + $0x4] sm:$0xf]
        %v597 = vld [vmem:[%s4 + $0x8] sm:$0xf]
        %v598 = vld [vmem:[%s4 + $0xc] sm:$0xf]
        %v599 = vld [vmem:[%s5] sm:$0xff]
        %v600 = vld [vmem:[%s5 + $0x8] sm:$0xff]
        %v601 = vld [vmem:[%s5 + $0x10] sm:$0xff]
        %v602 = vld [vmem:[%s5 + $0x18] sm:$0xff]
        %604 = vset.pattern.permute.xlu0 0
        %605 = vperm.xlu0 %604, %v599
        %v606 = vpop.permute.xlu0 %605
        %609 = vset.pattern.permute.xlu0 0
        %610 = vperm.xlu0 %609, %v600
        %v611 = vpop.permute.xlu0 %610
        %614 = vset.pattern.permute.xlu0 0
        %615 = vperm.xlu0 %614, %v601
        %v616 = vpop.permute.xlu0 %615
        %619 = vset.pattern.permute.xlu0 0
        %620 = vperm.xlu0 %619, %v602
        %v621 = vpop.permute.xlu0 %620
        %v627 = vunpack.c.l.b16 %v595
        %v628 = vunpack.c.l.b16 %v596
        %v629 = vunpack.c.l.b16 %v597
        %v630 = vunpack.c.l.b16 %v598
        %v631 = vpack.c.b16 %v628, %v627
        %v632 = vpack.c.b16 %v630, %v629
        %v634 = vsel %vm534, %v631, 0
        %v637 = vsel %vm534, %v632, 0
        %639 = vmatpush.bf16.msra.mxu0 0
        %640 = vmatpush.bf16.msra.mxu0 0
        %641 = vmatpush.bf16.msra.mxu0 0
        %642 = vmatpush.bf16.msra.mxu0 0
        %643 = vmatpush.bf16.msra.mxu0 0
        %644 = vmatpush.bf16.msra.mxu0 0
        %645 = vmatpush.bf16.msra.mxu0 %v482
        %646 = vmatpush.bf16.msra.mxu0 %v480
        %647 = vmatmul.bf16.gmra.mxu0 %v634
        %v648 = vpop.f32.mrf.mxu0
        %v649 = vadd.f32 %v606, %v648
        %v650 = vpop.f32.mrf.mxu0
        %v651 = vadd.f32 %v611, %v650
        %652 = vmatmul.bf16.gmra.mxu0 %v637
        %v653 = vpop.f32.mrf.mxu0
        %v654 = vadd.f32 %v616, %v653
        %v655 = vpop.f32.mrf.mxu0
        %v656 = vadd.f32 %v621, %v655
        %657 = vdwg.mxu0
        %658 = vmatpush.bf16.msra.mxu0 0
        %659 = vmatpush.bf16.msra.mxu0 0
        %660 = vmatpush.bf16.msra.mxu0 0
        %661 = vmatpush.bf16.msra.mxu0 0
        %662 = vmatpush.bf16.msra.mxu0 0
        %663 = vmatpush.bf16.msra.mxu0 0
        %664 = vmatpush.bf16.msra.mxu0 %v483
        %665 = vmatpush.bf16.msra.mxu0 %v481
        %666 = vmatmul.bf16.gmra.mxu0 %v634
        %v667 = vpop.f32.mrf.mxu0
        %v668 = vadd.f32 %v606, %v667
        %v669 = vpop.f32.mrf.mxu0
        %v670 = vadd.f32 %v611, %v669
        %671 = vmatmul.bf16.gmra.mxu0 %v637
        %v672 = vpop.f32.mrf.mxu0
        %v673 = vadd.f32 %v616, %v672
        %v674 = vpop.f32.mrf.mxu0
        %v675 = vadd.f32 %v621, %v674
        %676 = vdwg.mxu0
        %v677 = vmax.f32 %v649, 0.0
        %v678 = vmax.f32 %v668, 0.0
        %v679 = vmax.f32 %v651, 0.0
        %v680 = vmax.f32 %v670, 0.0
        %v681 = vmax.f32 %v654, 0.0
        %v682 = vmax.f32 %v673, 0.0
        %v683 = vmax.f32 %v656, 0.0
        %v684 = vmax.f32 %v675, 0.0
        %v685 = vpack.c.bf16 %v678, %v677
        %v686 = vpack.c.bf16 %v680, %v679
        %v687 = vpack.c.bf16 %v682, %v681
        %v688 = vpack.c.bf16 %v684, %v683
        %689 = vst [vmem:[%s458] sm:$0xff] %v685
        %690 = vst [vmem:[%s458 + $0x8] sm:$0xff] %v686
        %691 = vst [vmem:[%s458 + $0x10] sm:$0xff] %v687
        %692 = vst [vmem:[%s458 + $0x18] sm:$0xff] %v688
        %v693 = vld [vmem:[%s6] sm:$0xf]
        %v694 = vld [vmem:[%s6 + $0x4] sm:$0xf]
        %v695 = vld [vmem:[%s6 + $0x8] sm:$0xf]
        %v696 = vld [vmem:[%s6 + $0xc] sm:$0xf]
        %v697 = vld [vmem:[%s7] sm:$0xff]
        %v698 = vld [vmem:[%s7 + $0x8] sm:$0xff]
        %v699 = vld [vmem:[%s7 + $0x10] sm:$0xff]
        %v700 = vld [vmem:[%s7 + $0x18] sm:$0xff]
        %702 = vset.pattern.permute.xlu0 0
        %703 = vperm.xlu0 %702, %v697
        %v704 = vpop.permute.xlu0 %703
        %707 = vset.pattern.permute.xlu0 0
        %708 = vperm.xlu0 %707, %v698
        %v709 = vpop.permute.xlu0 %708
        %712 = vset.pattern.permute.xlu0 0
        %713 = vperm.xlu0 %712, %v699
        %v714 = vpop.permute.xlu0 %713
        %717 = vset.pattern.permute.xlu0 0
        %718 = vperm.xlu0 %717, %v700
        %v719 = vpop.permute.xlu0 %718
        %v725 = vunpack.c.l.b16 %v693
        %v726 = vunpack.c.l.b16 %v694
        %v727 = vunpack.c.l.b16 %v695
        %v728 = vunpack.c.l.b16 %v696
        %v729 = vpack.c.b16 %v726, %v725
        %v730 = vpack.c.b16 %v728, %v727
        %v732 = vsel %vm534, %v729, 0
        %v735 = vsel %vm534, %v730, 0
        %737 = vmatpush.bf16.msra.mxu0 0
        %738 = vmatpush.bf16.msra.mxu0 0
        %739 = vmatpush.bf16.msra.mxu0 0
        %740 = vmatpush.bf16.msra.mxu0 0
        %741 = vmatpush.bf16.msra.mxu0 0
        %742 = vmatpush.bf16.msra.mxu0 0
        %743 = vmatpush.bf16.msra.mxu0 %v494
        %744 = vmatpush.bf16.msra.mxu0 %v492
        %745 = vmatmul.bf16.gmra.mxu0 %v732
        %v746 = vpop.f32.mrf.mxu0
        %v747 = vadd.f32 %v704, %v746
        %v748 = vpop.f32.mrf.mxu0
        %v749 = vadd.f32 %v709, %v748
        %750 = vmatmul.bf16.gmra.mxu0 %v735
        %v751 = vpop.f32.mrf.mxu0
        %v752 = vadd.f32 %v714, %v751
        %v753 = vpop.f32.mrf.mxu0
        %v754 = vadd.f32 %v719, %v753
        %755 = vdwg.mxu0
        %756 = vmatpush.bf16.msra.mxu0 0
        %757 = vmatpush.bf16.msra.mxu0 0
        %758 = vmatpush.bf16.msra.mxu0 0
        %759 = vmatpush.bf16.msra.mxu0 0
        %760 = vmatpush.bf16.msra.mxu0 0
        %761 = vmatpush.bf16.msra.mxu0 0
        %762 = vmatpush.bf16.msra.mxu0 %v495
        %763 = vmatpush.bf16.msra.mxu0 %v493
        %764 = vmatmul.bf16.gmra.mxu0 %v732
        %v765 = vpop.f32.mrf.mxu0
        %v766 = vadd.f32 %v704, %v765
        %v767 = vpop.f32.mrf.mxu0
        %v768 = vadd.f32 %v709, %v767
        %769 = vmatmul.bf16.gmra.mxu0 %v735
        %v770 = vpop.f32.mrf.mxu0
        %v771 = vadd.f32 %v714, %v770
        %v772 = vpop.f32.mrf.mxu0
        %v773 = vadd.f32 %v719, %v772
        %774 = vdwg.mxu0
        %v775 = vmax.f32 %v747, 0.0
        %v776 = vmax.f32 %v766, 0.0
        %v777 = vmax.f32 %v749, 0.0
        %v778 = vmax.f32 %v768, 0.0
        %v779 = vmax.f32 %v752, 0.0
        %v780 = vmax.f32 %v771, 0.0
        %v781 = vmax.f32 %v754, 0.0
        %v782 = vmax.f32 %v773, 0.0
        %v783 = vpack.c.bf16 %v776, %v775
        %v784 = vpack.c.bf16 %v778, %v777
        %v785 = vpack.c.bf16 %v780, %v779
        %v786 = vpack.c.bf16 %v782, %v781
        %787 = vst [vmem:[%s465] sm:$0xff] %v783
        %788 = vst [vmem:[%s465 + $0x8] sm:$0xff] %v784
        %789 = vst [vmem:[%s465 + $0x10] sm:$0xff] %v785
        %790 = vst [vmem:[%s465 + $0x18] sm:$0xff] %v786
        %s791 = sand.u32 %s238, 1
        %s792 = scalar_lea.sflag [#allocation4], %s791
        %s793 = sand.u32 %s238, 1
        %s794 = smul.addr %s793, 32
        %s795 = scalar_lea.vmem [#allocation7], %s794
        %s796 = sand.u32 %s34, 1
        %s797 = scalar_lea.sflag [#allocation9], %s796
        %s798 = sand.u32 %s266, 1
        %s799 = smul.addr %s798, 32
        %s800 = scalar_lea.vmem [#allocation8], %s799
        %s801 = sand.u32 %s34, 1
        %s802 = scalar_lea.sflag [#allocation9], %s801
        %s803 = sand.u32 %s294, 1
        %s804 = smul.addr %s803, 32
        %s805 = scalar_lea.vmem [#allocation10], %s804
        // Predicated region
        $region61: #{tpu_custom_call.1} parent=51 // pred_check
          %p806 = pneg %p248
        $region62: #{tpu_custom_call.1} parent=51 // pred_check_branch
          %808 = sbr.rel (%p806) target = $region64
        $region63: #{tpu_custom_call.1} parent=51 // pred_region
          %s809 = smul.u32 2, %s39
          %811 = vsyncadd %s792, 0
          %s812 = smul.addr %s38, 72
          %s813 = sadd.s32 %s809, %s812
          %s814 = smul.addr %s813, 4
          %s815 = scalar_lea.hbm %s8, %s814
          %s816 = sshll.u32 %s795, 4
          %s817 = int_to_ptr.vmem [resolvable:$true] %s816
          %s818 = sshll.u32 %s815, 4
          %s819 = int_to_ptr.hbm [resolvable:$true] %s818
          %824 = dma.vmem_to_hbm [thread:$0]  %s817, 512, %s819, %s792, 128, 1152, 8
        $region64: #{tpu_custom_call.1} parent=51 // pred_fallthru
          _
        // Predicated region
        $region65: #{tpu_custom_call.1} parent=51 // pred_check
          %p825 = pneg %p276
        $region66: #{tpu_custom_call.1} parent=51 // pred_check_branch
          %827 = sbr.rel (%p825) target = $region68
        $region67: #{tpu_custom_call.1} parent=51 // pred_region
          %s828 = smul.u32 2, %s39
          %830 = vsyncadd %s797, 0
          %s831 = smul.addr %s38, 72
          %s832 = sadd.s32 %s828, %s831
          %s833 = smul.addr %s832, 4
          %s834 = scalar_lea.hbm %s9, %s833
          %s835 = sshll.u32 %s800, 4
          %s836 = int_to_ptr.vmem [resolvable:$true] %s835
          %s837 = sshll.u32 %s834, 4
          %s838 = int_to_ptr.hbm [resolvable:$true] %s837
          %843 = dma.vmem_to_hbm [thread:$0]  %s836, 512, %s838, %s797, 128, 1152, 8
        $region68: #{tpu_custom_call.1} parent=51 // pred_fallthru
          _
        // Predicated region
        $region69: #{tpu_custom_call.1} parent=51 // pred_check
          %p844 = pneg %p304
        $region70: #{tpu_custom_call.1} parent=51 // pred_check_branch
          %846 = sbr.rel (%p844) target = $region72
        $region71: #{tpu_custom_call.1} parent=51 // pred_region
          %s847 = smul.u32 2, %s39
          %849 = vsyncadd %s802, 0
          %s850 = smul.addr %s38, 72
          %s851 = sadd.s32 %s847, %s850
          %s852 = smul.addr %s851, 4
          %s853 = scalar_lea.hbm %s10, %s852
          %s854 = sshll.u32 %s805, 4
          %s855 = int_to_ptr.vmem [resolvable:$true] %s854
          %s856 = sshll.u32 %s853, 4
          %s857 = int_to_ptr.hbm [resolvable:$true] %s856
          %862 = dma.vmem_to_hbm [thread:$0]  %s855, 512, %s857, %s802, 128, 1152, 8
        $region72: #{tpu_custom_call.1} parent=51 // pred_fallthru
          _
      $region52: #{tpu_custom_call.1} parent=5 // pred_fallthru
        _
      %p863 = scmp.le.s32.totalorder 2, %s29
      // Predicated region
      $region73: #{tpu_custom_call.1} parent=5 // pred_check
        %p864 = pneg %p863
      $region74: #{tpu_custom_call.1} parent=5 // pred_check_branch
        %866 = sbr.rel (%p864) target = $region76
      $region75: #{tpu_custom_call.1} parent=5 // pred_region
        %s867 = ssub.s32 %s29, 2
        // Predicated region
        $region77: #{tpu_custom_call.1} parent=75 // pred_check
          %p868 = pneg %p254
        $region78: #{tpu_custom_call.1} parent=75 // pred_check_branch
          %870 = sbr.rel (%p868) target = $region80
        $region79: #{tpu_custom_call.1} parent=75 // pred_region
          %s871 = sand.u32 %s239, 1
          %s872 = scalar_lea.sflag [#allocation4], %s871
          %s873 = sand.u32 %s239, 1
          %s874 = smul.addr %s873, 32
          %s875 = scalar_lea.vmem [#allocation7], %s874
          %877 = dma.done %s872, 512
        $region80: #{tpu_custom_call.1} parent=75 // pred_fallthru
          _
        // Predicated region
        $region81: #{tpu_custom_call.1} parent=75 // pred_check
          %p878 = pneg %p282
        $region82: #{tpu_custom_call.1} parent=75 // pred_check_branch
          %880 = sbr.rel (%p878) target = $region84
        $region83: #{tpu_custom_call.1} parent=75 // pred_region
          %s881 = sand.u32 %s35, 1
          %s882 = scalar_lea.sflag [#allocation9], %s881
          %s883 = sand.u32 %s267, 1
          %s884 = smul.addr %s883, 32
          %s885 = scalar_lea.vmem [#allocation8], %s884
          %887 = dma.done %s882, 512
        $region84: #{tpu_custom_call.1} parent=75 // pred_fallthru
          _
        // Predicated region
        $region85: #{tpu_custom_call.1} parent=75 // pred_check
          %p888 = pneg %p310
        $region86: #{tpu_custom_call.1} parent=75 // pred_check_branch
          %890 = sbr.rel (%p888) target = $region88
        $region87: #{tpu_custom_call.1} parent=75 // pred_region
          %s891 = sand.u32 %s35, 1
          %s892 = scalar_lea.sflag [#allocation9], %s891
          %s893 = sand.u32 %s295, 1
          %s894 = smul.addr %s893, 32
          %s895 = scalar_lea.vmem [#allocation10], %s894
          %897 = dma.done %s892, 512
        $region88: #{tpu_custom_call.1} parent=75 // pred_fallthru
          _
      $region76: #{tpu_custom_call.1} parent=5 // pred_fallthru
        _
    $region6: #{tpu_custom_call.1} parent=1 // loop_footer
      %s33 = sadd.s32 1, %s29
    $region7: #{tpu_custom_call.1} parent=1 // loop_footer_branch
      %28 = sbr.rel target = $region3
    $region8: #{tpu_custom_call.1} parent=1 // loop_exit
      _
    %898 = vsyncpa [#allocation3], 1
    %s899 = scalar_lea.sflag [#allocation3], 1
    %900 = vsyncpa %s899, 1
    %901 = vsyncpa [#allocation6], 1
    %s902 = scalar_lea.sflag [#allocation6], 1
    %903 = vsyncpa %s902, 1
    %904 = vsyncpa [#allocation4], 1
    %s905 = scalar_lea.sflag [#allocation4], 1
    %906 = vsyncpa %s905, 1
    %907 = vsyncpa [#allocation9], 1
    %s908 = scalar_lea.sflag [#allocation9], 1
    %909 = vsyncpa %s908, 1

</llo_original>
